<compile_context>
chip_gen: v7x
topology: tpu7x:2x2x1
jax: 0.10.0
libtpu: 0.0.40
codegen_flags: <defaults>
</compile_context>

<pallas_src>
import functools
import math

import jax
import jax.numpy as jnp
import numpy as np
from jax import lax
from jax.experimental import pallas as pl
from jax.experimental.pallas import tpu as pltpu

NUM_SHARDS = 2  # v7x has 2 TensorCores; a serial 2-way split elsewhere is free.


def _single_block_sum_kernel(x_ref, o_ref):
    """Whole array fits in one VMEM block: one reduce, one store."""
    o_ref[...] = x_ref[...].astype(jnp.float32).sum(axis=0, keepdims=True)


def _sharded_row_sum_kernel(x_ref, o_ref, *, tr, steps_per_shard, total_rows,
                            first_masked_block):
    """Accumulate row-sums of (tr, W) slabs into a resident (8, W) output block.

    Grid = (shard, step). Each shard owns a contiguous range of row-blocks and
    its own (8, W) f32 output block (resident across the 'arbitrary' step
    axis). Row folding uses only VPU adds; no per-step cross-sublane reduce,
    no MXU, no transcendentals.
    """
    c = pl.program_id(0)                      # shard (a TensorCore on v7x)
    i = pl.program_id(1)                      # step inside the shard
    gidx = c * steps_per_shard + i            # unclamped global block index

    @pl.when(i == 0)
    def _():
        o_ref[...] = jnp.zeros_like(o_ref)

    x = x_ref[...].astype(jnp.float32)        # (tr, W)
    lane_w = x.shape[-1]

    def _accum(vals):
        # Fold tr rows into 8 sublane rows: pure vreg-chain of VALU adds.
        o_ref[...] += vals.reshape(tr // 8, 8, lane_w).sum(axis=0)

    if first_masked_block is None:
        _accum(x)
    else:
        in_bounds = gidx < first_masked_block

        @pl.when(in_bounds)
        def _():
            _accum(x)

        @pl.when(jnp.logical_not(in_bounds))
        def _():
            # Ragged tail / duplicated trailing block: zero rows past the end.
            row = gidx * tr + lax.broadcasted_iota(jnp.int32, (tr, 1), 0)
            _accum(jnp.where(row < total_rows, x, 0.0))


def _chip_budget():
    """Return (max input-block bytes, explicit vmem_limit_bytes or None)."""
    try:
        kind = jax.devices()[0].device_kind.lower()
    except Exception:  # defensive
        kind = ""
    if "v6" in kind:                       # v6e: 128 MiB VMEM, ~1.4 TB/s
        return 16 << 20, 64 << 20
    if "v7" in kind or "7x" in kind:       # v7x: 64 MiB VMEM/TC, ~3.2 TB/s, 2 TCs
        return 12 << 20, 48 << 20
    if "v5e" in kind or "v5 lite" in kind or "v5lite" in kind:
        return 8 << 20, 32 << 20           # v5e default scoped VMEM is 16 MiB
    return 4 << 20, None                   # unknown: stay under default limits


def _lane_width(h, n_elems):
    """Lane-dense row width: a multiple of both H and 128 that divides N."""
    if h % 128 == 0:
        return h
    w = h * (128 // math.gcd(h, 128))      # lcm(H, 128)
    if w <= 4096 and n_elems % w == 0:
        return w
    return h                               # fallback: Pallas pads the lane dim


def einsum_reduce_decoder(x, w=None, bias=None, *, block_bytes=None,
                          vmem_limit_bytes=None):
    """Forward pass of EinsumReduceDecoder.

    x: (B, S, H).  w: (H, 1) and bias: (1, 1) are the nn.Linear(d_model, 1)
    parameters; softmax over the size-1 attention axis is identically 1.0 (for
    finite logits), so they cancel exactly and are not read.
    Returns (H,) == (softmax(x @ w + b, -1) * x).sum(S).mean(B)
                 == x.sum(axis=(0, 1)) / B.
    """
    del w, bias  # provably no-ops under softmax(-1) of a (B, S, 1) tensor
    B, S, H = x.shape
    n_elems = B * S * H
    itemsize = x.dtype.itemsize

    default_block, default_vmem = _chip_budget()
    block_bytes = default_block if block_bytes is None else block_bytes
    vmem_limit_bytes = default_vmem if vmem_limit_bytes is None else vmem_limit_bytes

    W = _lane_width(H, n_elems)
    R = n_elems // W                       # W always divides n_elems
    x2 = x.reshape(R, W)                   # contiguous -> free reshape
    fold = W // H
    inv_b = 1.0 / B

    # Rows per block: multiple of 32 sublanes (safe for f32/bf16/int8 packing),
    # sized so a 2x double-buffered block stays inside the VMEM budget.
    max_rows = max(32, (block_bytes // (W * itemsize)) // 32 * 32)

    if R <= max_rows:
        # Small input: a single resident block, one grid step.
        partial = pl.pallas_call(
            _single_block_sum_kernel,
            out_shape=jax.ShapeDtypeStruct((1, W), jnp.float32),
            grid_spec=pltpu.PrefetchScalarGridSpec(
                num_scalar_prefetch=0,
                grid=(1,),
                in_specs=[pl.BlockSpec((R, W), lambda i: (0, 0))],
                out_specs=pl.BlockSpec((1, W), lambda i: (0, 0)),
            ),
            compiler_params=pltpu.CompilerParams(
                dimension_semantics=("arbitrary",),
                vmem_limit_bytes=vmem_limit_bytes,
            ),
            cost_estimate=pl.CostEstimate(
                flops=n_elems, transcendentals=0,
                bytes_accessed=n_elems * itemsize + W * 4),
        )(x2)
    else:
        tr = max_rows
        total_steps = -(-R // tr)                      # >= 2 here
        num_shards = min(NUM_SHARDS, total_steps)
        steps_per_shard = -(-total_steps // num_shards)

        # First global block index whose rows need masking (the ragged tail
        # block and any duplicated out-of-range blocks). None => never mask.
        first_masked = total_steps - 1 if (R % tr) else total_steps
        if first_masked >= num_shards * steps_per_shard:
            first_masked = None

        kernel = functools.partial(
            _sharded_row_sum_kernel,
            tr=tr,
            steps_per_shard=steps_per_shard,
            total_rows=R,
            first_masked_block=first_masked,
        )

        def x_index(c, i):
            # Clamp so over-allocated trailing blocks re-read the last real
            # block; their contribution is fully masked out inside the kernel.
            return (jnp.minimum(c * steps_per_shard + i, total_steps - 1), 0)

        partial = pl.pallas_call(
            kernel,
            out_shape=jax.ShapeDtypeStruct((num_shards * 8, W), jnp.float32),
            grid_spec=pltpu.PrefetchScalarGridSpec(
                num_scalar_prefetch=0,
                grid=(num_shards, steps_per_shard),
                in_specs=[pl.BlockSpec((tr, W), x_index)],
                out_specs=pl.BlockSpec((8, W), lambda c, i: (c, 0)),
            ),
            compiler_params=pltpu.CompilerParams(
                dimension_semantics=("parallel", "arbitrary"),
                vmem_limit_bytes=vmem_limit_bytes,
            ),
            cost_estimate=pl.CostEstimate(
                flops=n_elems, transcendentals=0,
                bytes_accessed=n_elems * itemsize + num_shards * 8 * W * 4),
        )(x2)

    # Tiny finisher in plain JAX: cross-sublane/shard reduce, lane->channel
    # fold, mean over the true batch size, cast back to the input dtype.
    total = partial.sum(axis=0)                        # (W,)
    if fold > 1:
        total = total.reshape(fold, H).sum(axis=0)     # (H,)
    return (total * inv_b).astype(x.dtype)


def reference(x, w, bias):
    logits = jnp.einsum("bsh,ho->bso", x, w) + bias.reshape(1, 1, 1)
    attn = jax.nn.softmax(logits, axis=-1)
    pooled = jnp.einsum("bso,bsd->bd", attn, x)
    return pooled.mean(-2)


if __name__ == "__main__":
    key = jax.random.PRNGKey(0)
    kx, kw, kb, kx2 = jax.random.split(key, 4)

    # Small shape implied by the module: (B, S, H) = (2, 8, 32), d_model = 32.
    B, S, H = 2, 8, 32
    x = jax.random.normal(kx, (B, S, H), dtype=jnp.float32)

    # Deterministic nn.Linear(d_model, 1)-style init: U(-1/sqrt(H), 1/sqrt(H)).
    bound = 1.0 / np.sqrt(H)
    w = jax.random.uniform(kw, (H, 1), minval=-bound, maxval=bound,
                           dtype=jnp.float32)
    bias = jax.random.uniform(kb, (1, 1), minval=-bound, maxval=bound,
                              dtype=jnp.float32)

    out = jax.block_until_ready(einsum_reduce_decoder(x, w, bias))
    assert out.shape == (H,), out.shape
    np.testing.assert_allclose(np.asarray(out), np.asarray(reference(x, w, bias)),
                               rtol=1e-5, atol=1e-5)

    # Also exercise the tiled dual-shard ("parallel","arbitrary") path with a
    # ragged tail by forcing a small per-block budget.
    B2, S2, H2 = 3, 500, 32
    x_big = jax.random.normal(kx2, (B2, S2, H2), dtype=jnp.float32)
    out_big = jax.block_until_ready(
        einsum_reduce_decoder(x_big, w, bias, block_bytes=64 << 10))
    assert out_big.shape == (H2,), out_big.shape
    np.testing.assert_allclose(np.asarray(out_big),
                               np.asarray(reference(x_big, w, bias)),
                               rtol=1e-4, atol=1e-4)

    print("KERNEL_OK")
</pallas_src>

<mosaic_0001>
module attributes {stable_mosaic.version = 11 : i64} {
  func.func @_single_block_sum_kernel(%arg0: i32, %arg1: memref<4x128xf32, #tpu.memory_space<vmem>>, %arg2: memref<1x128xf32, #tpu.memory_space<vmem>>) attributes {dimension_semantics = [#tpu.dimension_semantics<arbitrary>], iteration_bounds = array<i64: 1>, scalar_prefetch = 0 : i64, scratch_operands = 0 : i64, tpu.core_type = #tpu.core_type<tc>, window_params = [{pipeline_mode = #tpu.pipeline_mode<synchronous>, transform_indices = @transform_0, window_bounds = array<i64: 4, 128>}, {pipeline_mode = #tpu.pipeline_mode<synchronous>, transform_indices = @transform_1, window_bounds = array<i64: 1, 128>}]} {
    %c0 = arith.constant 0 : index
    %c0_0 = arith.constant 0 : index
    %0 = vector.load %arg1[%c0, %c0_0] : memref<4x128xf32, #tpu.memory_space<vmem>>, vector<4x128xf32>
    %cst = arith.constant dense<0.000000e+00> : vector<128xf32>
    %1 = vector.multi_reduction <add>, %0, %cst [0] : vector<4x128xf32> to vector<128xf32>
    %2 = vector.shape_cast %1 : vector<128xf32> to vector<1x128xf32>
    %c0_1 = arith.constant 0 : index
    %c0_2 = arith.constant 0 : index
    %3 = vector.load %arg2[%c0_1, %c0_2] : memref<1x128xf32, #tpu.memory_space<vmem>>, vector<1x128xf32>
    tpu.vector_store %arg2[%c0_1, %c0_2], %2 {strides = array<i32>} : memref<1x128xf32, #tpu.memory_space<vmem>>, vector<1x128xf32>,
    return
  }
  func.func @transform_0(%arg0: i32) -> (i32, i32) {
    %c0_i32 = arith.constant 0 : i32
    %c0_i32_0 = arith.constant 0 : i32
    %c0_i32_1 = arith.constant 0 : i32
    return %c0_i32, %c0_i32_0 : i32, i32
  }
  func.func @transform_1(%arg0: i32) -> (i32, i32) {
    %c0_i32 = arith.constant 0 : i32
    %c0_i32_0 = arith.constant 0 : i32
    %c0_i32_1 = arith.constant 0 : i32
    return %c0_i32, %c0_i32_0 : i32, i32
  }
}

</mosaic_0001>

<llo_original>
// kernel: tpu_custom_call.1
$region0: #{tpu_custom_call.1}
  #allocation0 [shape = 'u32[]', space=smem, size = 0x4, offset = 0x4, fixed_abs, tag = 'smem constant byte address 0x4 - core index']
  #allocation1 [shape = 'u32[144,128]{1,0:T(1,128)}', space=vmem, size = 0x12000, scoped, tag = 'internal scratch']
  %s0 = inlined_call_operand.hbm [shape: f32[4,128], index: 0, kind: input, shape index: {}]
  %s1 = inlined_call_operand.hbm [shape: f32[1,128], index: 1, kind: output, shape index: {}]
  %s2 = sld [smem:[#allocation0]]
  $region18: #{tpu_custom_call.1} parent=0
    _
  %s4 = ssub.s32 1, %s2
  %s5 = scalar_select 0, %s4, %s2
  $region1: #{tpu_custom_call.1} parent=0
    #allocation2 [shape = 'u8[2048]{0}', space=vmem, size = 0x800, scoped, tag = 'input window, operand 0, single buffered']
    #allocation3 [shape = 's32[1]{0}', space=sflag, size = 0x4, scoped, tag = 'scoped memory for tpu_custom_call.1']
    #allocation4 [shape = 's32[1]{0}', space=sflag, size = 0x4, scoped, tag = 'scoped memory for tpu_custom_call.1']
    #allocation5 [shape = 'u8[512]{0}', space=vmem, size = 0x400, scoped, tag = 'output window, operand 0, single buffered']
    %6 = vsyncpa [#allocation3], 0
    %7 = vsyncpa [#allocation4], 0
    // Predicated region
    $region2: #{tpu_custom_call.1} parent=1 // pred_check
      _
    $region3: #{tpu_custom_call.1} parent=1 // pred_check_branch
      %9 = sbr.rel (0) target = $region5
    $region4: #{tpu_custom_call.1} parent=1 // pred_region
      %s11 = ssub.s32 64, 64
      %12 = vsyncadd [#allocation3], %s11
      %s14 = sshll.u32 [#allocation2], 4
      %s15 = int_to_ptr.vmem [resolvable:$true] %s14
      %17 = dma.hbm_to_vmem [thread:$0]  %s0, 64, %s15, [#allocation3]
    $region5: #{tpu_custom_call.1} parent=1 // pred_fallthru
      _
    // Predicated region
    $region6: #{tpu_custom_call.1} parent=1 // pred_check
      _
    $region7: #{tpu_custom_call.1} parent=1 // pred_check_branch
      %19 = sbr.rel (0) target = $region9
    $region8: #{tpu_custom_call.1} parent=1 // pred_region
      %20 = dma.done [#allocation3], 64
    $region9: #{tpu_custom_call.1} parent=1 // pred_fallthru
      _
    %v21 = vld [vmem:[#allocation2] sm:$0xf]
    %vm22 = vcmask 1043456
    %v23 = vsel %vm22, %v21, 0.0
    %v24 = vrot.slane %v23, 4
    %v25 = vadd.f32 %v23, %v24
    %v26 = vrot.slane %v25, 2
    %v27 = vadd.f32 %v25, %v26
    %v28 = vrot.slane %v27, 1
    %v29 = vadd.f32 %v27, %v28
    %30 = vst [vmem:[#allocation5] sm:$0x1] %v29
    // Predicated region
    $region10: #{tpu_custom_call.1} parent=1 // pred_check
      _
    $region11: #{tpu_custom_call.1} parent=1 // pred_check_branch
      %32 = sbr.rel (0) target = $region13
    $region12: #{tpu_custom_call.1} parent=1 // pred_region
      %s34 = ssub.s32 16, 16
      %35 = vsyncadd [#allocation4], %s34
      %s37 = sshll.u32 [#allocation5], 4
      %s38 = int_to_ptr.vmem [resolvable:$true] %s37
      %40 = dma.vmem_to_hbm [thread:$0]  %s38, 16, %s1, [#allocation4]
    $region13: #{tpu_custom_call.1} parent=1 // pred_fallthru
      _
    // Predicated region
    $region14: #{tpu_custom_call.1} parent=1 // pred_check
      _
    $region15: #{tpu_custom_call.1} parent=1 // pred_check_branch
      %42 = sbr.rel (0) target = $region17
    $region16: #{tpu_custom_call.1} parent=1 // pred_region
      %43 = dma.done [#allocation4], 16
    $region17: #{tpu_custom_call.1} parent=1 // pred_fallthru
      _
    %44 = vsyncpa [#allocation3], 1
    %45 = vsyncpa [#allocation4], 1

</llo_original>
